<compile_context>
chip_gen: v7x
topology: tpu7x:2x2x1
jax: 0.10.0
libtpu: 0.0.40
codegen_flags: <defaults>
</compile_context>

<pallas_src>
import functools

import jax
import jax.numpy as jnp
from jax import lax
from jax.experimental import pallas as pl
from jax.experimental.pallas import tpu as pltpu

LANES = 128
SLAB = 512                       # rows per inner-loop slab (multiple of 8)
TARGET_BLOCK_BYTES = 4 * 1024 * 1024   # per input per grid step
SMALL_N_THRESHOLD = 1 << 16      # below this, a fused XLA reduction wins


def _ssq_kernel(block_rows, slab, nrows_ref, yhat_ref, y_ref, out_ref, acc_ref):
    """Per-core sum of squared differences over a (rows, 128) f32/bf16 view.

    nrows_ref: SMEM (1,) int32  -- valid row count of the 2-D view (prefetch)
    acc_ref:   VMEM (8, 128) f32 -- vreg-shaped running partial sums (per core)
    out_ref:   SMEM (1, 1) f32  -- this core's sum of squares
    """
    c = pl.program_id(0)              # core-split index ("parallel")
    i = pl.program_id(1)              # row-block index  ("arbitrary")
    n_inner = pl.num_programs(1)

    @pl.when(i == 0)
    def _():
        acc_ref[...] = jnp.zeros_like(acc_ref)

    # Logical (unclamped) first row of this block.  Blocks whose logical start
    # is past the end (duplicated/clamped DMA) see remaining <= 0 and are fully
    # masked, contributing exactly zero.
    row_start = (c * n_inner + i) * block_rows
    remaining = nrows_ref[0] - row_start          # valid rows at/after row_start
    n_slabs = block_rows // slab

    def partial_ssq(d):
        # (slab, 128) -> (8, 128) log-depth fold: pure VPU adds, no XLU, no
        # block-sized VMEM temp (slices stay on 8-row tile boundaries).
        r = d * d
        rows = slab
        while rows > 8:
            half = rows // 2
            r = r[:half, :] + r[half:, :]
            rows = half
        return r

    @pl.when(remaining >= block_rows)             # interior block: no masking
    def _():
        @pl.loop(0, n_slabs)
        def _(s):
            r0 = pl.multiple_of(s * slab, slab)
            d = (yhat_ref[pl.ds(r0, slab), :].astype(jnp.float32)
                 - y_ref[pl.ds(r0, slab), :].astype(jnp.float32))
            acc_ref[...] += partial_ssq(d)

    @pl.when(remaining < block_rows)              # ragged block: row-only mask
    def _():
        base_row = lax.broadcasted_iota(jnp.int32, (slab, LANES), 0)  # hoisted
        @pl.loop(0, n_slabs)
        def _(s):
            r0 = pl.multiple_of(s * slab, slab)
            d = (yhat_ref[pl.ds(r0, slab), :].astype(jnp.float32)
                 - y_ref[pl.ds(r0, slab), :].astype(jnp.float32))
            d = jnp.where(base_row + r0 < remaining, d, 0.0)
            acc_ref[...] += partial_ssq(d)

    @pl.when(i == n_inner - 1)
    def _():
        out_ref[0, 0] = jnp.sum(acc_ref[...])     # single cross-lane reduce


def rmse_loss(y_hat: jax.Array, y: jax.Array, *,
              block_bytes: int = TARGET_BLOCK_BYTES,
              min_pallas_elements: int = SMALL_N_THRESHOLD) -> jax.Array:
    """RMSE = sqrt(mean((y_hat - y)**2)); returns a float32 scalar."""
    assert y_hat.shape == y.shape, "y_hat and y must have the same shape"
    n = int(y_hat.size)
    assert n > 0, "empty input"

    rows = n // LANES
    tail = n - rows * LANES

    # Small-N fast path (or not even one full 128-lane row).
    if n < min_pallas_elements or rows == 0:
        d = jnp.ravel(y_hat).astype(jnp.float32) - jnp.ravel(y).astype(jnp.float32)
        return jnp.sqrt(jnp.mean(d * d))

    yh = jnp.ravel(y_hat)
    yt = jnp.ravel(y)

    # Kernel streams the contiguous multiple-of-128 prefix in NATIVE dtype
    # (no padded copies of the inputs); <128-element remainder handled below.
    main = rows * LANES
    yh2 = yh[:main].reshape(rows, LANES)
    yt2 = yt[:main].reshape(rows, LANES)

    # Dtype-scaled block rows (~block_bytes per input per step), multiple of SLAB.
    itemsize = max(y_hat.dtype.itemsize, y.dtype.itemsize)
    br = block_bytes // (LANES * itemsize)
    br = (br // SLAB) * SLAB
    rows_up = ((rows + SLAB - 1) // SLAB) * SLAB
    br = max(SLAB, min(br, rows_up))
    assert br % SLAB == 0

    nb = (rows + br - 1) // br                   # total row-blocks
    nsplit = 2 if nb >= 2 else 1                 # split across 2 TCs (v7x)
    nbh = (nb + nsplit - 1) // nsplit            # row-blocks per core

    nrows_arr = jnp.array([rows], dtype=jnp.int32)   # scalar prefetch -> SMEM

    def in_map(c, i, nrows_ref):
        # Clamp so a short last core never requests an out-of-range block; the
        # duplicated block is fully masked in-kernel (remaining <= 0).
        return (jnp.minimum(c * nbh + i, nb - 1), 0)

    partials = pl.pallas_call(
        functools.partial(_ssq_kernel, br, SLAB),
        out_shape=jax.ShapeDtypeStruct((nsplit, 1), jnp.float32),
        grid_spec=pltpu.PrefetchScalarGridSpec(
            num_scalar_prefetch=1,
            grid=(nsplit, nbh),
            in_specs=[
                pl.BlockSpec((br, LANES), in_map),
                pl.BlockSpec((br, LANES), in_map),
            ],
            out_specs=pl.BlockSpec((1, 1), lambda c, i, nrows_ref: (c, 0),
                                   memory_space=pltpu.SMEM),
            scratch_shapes=[pltpu.VMEM((8, LANES), jnp.float32)],
        ),
        compiler_params=pltpu.CompilerParams(
            dimension_semantics=("parallel", "arbitrary"),
            # 2 inputs x 2 pipeline buffers x ~4 MiB = ~16 MiB (+ slab temps);
            # raise above v5e's 16 MiB default scoped limit, well under 32 MiB.
            vmem_limit_bytes=32 * 1024 * 1024,
        ),
    )(nrows_arr, yh2, yt2)

    total = jnp.sum(partials)
    if tail:
        td = yh[main:].astype(jnp.float32) - yt[main:].astype(jnp.float32)
        total = total + jnp.sum(td * td)
    return jnp.sqrt(total / jnp.float32(n))


def _ref_rmse(a, b):
    d = jnp.ravel(a).astype(jnp.float32) - jnp.ravel(b).astype(jnp.float32)
    return jnp.sqrt(jnp.mean(d * d))


if __name__ == "__main__":
    key = jax.random.PRNGKey(0)
    k1, k2 = jax.random.split(key)

    # 1-D vector of "atomisation energies": N not a multiple of 128.
    n_big = 300_000
    yh = jax.random.normal(k1, (n_big,), dtype=jnp.float32)
    yt = jax.random.normal(k2, (n_big,), dtype=jnp.float32)
    ref = _ref_rmse(yh, yt)

    # 1) Default config: single large block + ragged-row mask + XLA tail.
    loss = rmse_loss(yh, yt)
    jax.block_until_ready(loss)
    assert jnp.allclose(loss, ref, rtol=1e-5, atol=1e-6), (loss, ref)

    # 2) Small blocks to exercise multi-block accumulation, the 2-way core
    #    split, the clamped duplicate block, and the masked tail block.
    loss_mb = rmse_loss(yh, yt, block_bytes=512 * 1024)
    jax.block_until_ready(loss_mb)
    assert jnp.allclose(loss_mb, ref, rtol=1e-5, atol=1e-6), (loss_mb, ref)

    # 3) bf16 inputs travel in native dtype; f32 cast happens inside the kernel.
    yh_bf = yh.astype(jnp.bfloat16)
    yt_bf = yt.astype(jnp.bfloat16)
    loss_bf = rmse_loss(yh_bf, yt_bf)
    jax.block_until_ready(loss_bf)
    ref_bf = _ref_rmse(yh_bf, yt_bf)
    assert jnp.allclose(loss_bf, ref_bf, rtol=1e-5, atol=1e-6), (loss_bf, ref_bf)

    # 4) Small vector forced through the Pallas path (rows=7 + 104-element tail).
    n_small = 1000
    yh_s = jax.random.normal(k1, (n_small,), dtype=jnp.float32)
    yt_s = jax.random.normal(k2, (n_small,), dtype=jnp.float32)
    ref_s = _ref_rmse(yh_s, yt_s)
    loss_s = rmse_loss(yh_s, yt_s, min_pallas_elements=0)
    jax.block_until_ready(loss_s)
    assert jnp.allclose(loss_s, ref_s, rtol=1e-5, atol=1e-6), (loss_s, ref_s)

    # 5) Small-N fast path (pure XLA).
    loss_fast = rmse_loss(yh_s, yt_s)
    jax.block_until_ready(loss_fast)
    assert jnp.allclose(loss_fast, ref_s, rtol=1e-5, atol=1e-6), (loss_fast, ref_s)

    print("KERNEL_OK")
</pallas_src>

<mosaic_0001>
module attributes {stable_mosaic.version = 11 : i64} {
  func.func @_ssq_kernel(%arg0: i32, %arg1: i32, %arg2: memref<1xi32, #tpu.memory_space<smem>>, %arg3: memref<2560x128xf32, #tpu.memory_space<vmem>>, %arg4: memref<2560x128xf32, #tpu.memory_space<vmem>>, %arg5: memref<1x1xf32, #tpu.memory_space<smem>>, %arg6: memref<8x128xf32, #tpu.memory_space<vmem>>) attributes {dimension_semantics = [#tpu.dimension_semantics<parallel>, #tpu.dimension_semantics<arbitrary>], iteration_bounds = array<i64: 1, 1>, scalar_prefetch = 1 : i64, scratch_operands = 1 : i64, tpu.core_type = #tpu.core_type<tc>, window_params = [{transform_indices = @transform_0, window_bounds = array<i64: 2560, 128>}, {transform_indices = @transform_1, window_bounds = array<i64: 2560, 128>}, {transform_indices = @transform_2, window_bounds = array<i64: 1, 1>}]} {
    %c0_i32 = arith.constant 0 : i32
    %0 = arith.cmpi eq, %arg1, %c0_i32 : i32
    %1 = arith.extui %0 : i1 to i32
    %c0_i32_0 = arith.constant 0 : i32
    %2 = arith.cmpi ne, %1, %c0_i32_0 : i32
    scf.if %2 {
      %cst = arith.constant 0.000000e+00 : f32
      %17 = vector.broadcast %cst : f32 to vector<8x128xf32>
      %c0_7 = arith.constant 0 : index
      %c0_8 = arith.constant 0 : index
      %18 = vector.load %arg6[%c0_7, %c0_8] : memref<8x128xf32, #tpu.memory_space<vmem>>, vector<8x128xf32>
      tpu.vector_store %arg6[%c0_7, %c0_8], %17 {strides = array<i32>} : memref<8x128xf32, #tpu.memory_space<vmem>>, vector<8x128xf32>,
    } else {
    }
    %c1_i32 = arith.constant 1 : i32
    %3 = arith.muli %arg0, %c1_i32 : i32
    %4 = arith.addi %3, %arg1 : i32
    %c2560_i32 = arith.constant 2560 : i32
    %5 = arith.muli %4, %c2560_i32 : i32
    %c0 = arith.constant 0 : index
    %6 = memref.load %arg2[%c0] : memref<1xi32, #tpu.memory_space<smem>>
    %7 = arith.subi %6, %5 : i32
    %c2560_i32_1 = arith.constant 2560 : i32
    %8 = arith.cmpi sge, %7, %c2560_i32_1 : i32
    %9 = arith.extui %8 : i1 to i32
    %c0_i32_2 = arith.constant 0 : i32
    %10 = arith.cmpi ne, %9, %c0_i32_2 : i32
    scf.if %10 {
      %c0_i32_7 = arith.constant 0 : i32
      %c5_i32 = arith.constant 5 : i32
      %17 = arith.addi %c0_i32_7, %c5_i32 : i32
      %c1_i32_8 = arith.constant 1 : i32
      scf.for %arg7 = %c0_i32_7 to %17 step %c1_i32_8  : i32 {
        %c1_i32_10 = arith.constant 1 : i32
        %18 = arith.muli %arg7, %c1_i32_10 : i32
        %c0_i32_11 = arith.constant 0 : i32
        %19 = arith.addi %c0_i32_11, %18 : i32
        %c512_i32 = arith.constant 512 : i32
        %20 = arith.muli %19, %c512_i32 : i32
        %21 = tpu.assume_multiple %20, 512 : i32
        %22 = arith.index_cast %21 : i32 to index
        %c0_12 = arith.constant 0 : index
        %23 = vector.load %arg3[%22, %c0_12] : memref<2560x128xf32, #tpu.memory_space<vmem>>, vector<512x128xf32>
        %24 = arith.index_cast %21 : i32 to index
        %c0_13 = arith.constant 0 : index
        %25 = vector.load %arg4[%24, %c0_13] : memref<2560x128xf32, #tpu.memory_space<vmem>>, vector<512x128xf32>
        %26 = arith.subf %23, %25 : vector<512x128xf32>
        %c0_14 = arith.constant 0 : index
        %c0_15 = arith.constant 0 : index
        %27 = vector.load %arg6[%c0_14, %c0_15] : memref<8x128xf32, #tpu.memory_space<vmem>>, vector<8x128xf32>
        %28 = arith.mulf %26, %26 : vector<512x128xf32>
        %29 = vector.extract_strided_slice %28 {offsets = [0, 0], sizes = [256, 128], strides = [1, 1]} : vector<512x128xf32> to vector<256x128xf32>
        %30 = vector.extract_strided_slice %28 {offsets = [256, 0], sizes = [256, 128], strides = [1, 1]} : vector<512x128xf32> to vector<256x128xf32>
        %31 = arith.addf %29, %30 : vector<256x128xf32>
        %32 = vector.extract_strided_slice %31 {offsets = [0, 0], sizes = [128, 128], strides = [1, 1]} : vector<256x128xf32> to vector<128x128xf32>
        %33 = vector.extract_strided_slice %31 {offsets = [128, 0], sizes = [128, 128], strides = [1, 1]} : vector<256x128xf32> to vector<128x128xf32>
        %34 = arith.addf %32, %33 : vector<128x128xf32>
        %35 = vector.extract_strided_slice %34 {offsets = [0, 0], sizes = [64, 128], strides = [1, 1]} : vector<128x128xf32> to vector<64x128xf32>
        %36 = vector.extract_strided_slice %34 {offsets = [64, 0], sizes = [64, 128], strides = [1, 1]} : vector<128x128xf32> to vector<64x128xf32>
        %37 = arith.addf %35, %36 : vector<64x128xf32>
        %38 = vector.extract_strided_slice %37 {offsets = [0, 0], sizes = [32, 128], strides = [1, 1]} : vector<64x128xf32> to vector<32x128xf32>
        %39 = vector.extract_strided_slice %37 {offsets = [32, 0], sizes = [32, 128], strides = [1, 1]} : vector<64x128xf32> to vector<32x128xf32>
        %40 = arith.addf %38, %39 : vector<32x128xf32>
        %41 = vector.extract_strided_slice %40 {offsets = [0, 0], sizes = [16, 128], strides = [1, 1]} : vector<32x128xf32> to vector<16x128xf32>
        %42 = vector.extract_strided_slice %40 {offsets = [16, 0], sizes = [16, 128], strides = [1, 1]} : vector<32x128xf32> to vector<16x128xf32>
        %43 = arith.addf %41, %42 : vector<16x128xf32>
        %44 = vector.extract_strided_slice %43 {offsets = [0, 0], sizes = [8, 128], strides = [1, 1]} : vector<16x128xf32> to vector<8x128xf32>
        %45 = vector.extract_strided_slice %43 {offsets = [8, 0], sizes = [8, 128], strides = [1, 1]} : vector<16x128xf32> to vector<8x128xf32>
        %46 = arith.addf %44, %45 : vector<8x128xf32>
        %47 = arith.addf %27, %46 : vector<8x128xf32>
        %c0_16 = arith.constant 0 : index
        %c0_17 = arith.constant 0 : index
        %48 = vector.load %arg6[%c0_16, %c0_17] : memref<8x128xf32, #tpu.memory_space<vmem>>, vector<8x128xf32>
        tpu.vector_store %arg6[%c0_16, %c0_17], %47 {strides = array<i32>} : memref<8x128xf32, #tpu.memory_space<vmem>>, vector<8x128xf32>,
      }
      %c5_i32_9 = arith.constant 5 : i32
    } else {
    }
    %c2560_i32_3 = arith.constant 2560 : i32
    %11 = arith.cmpi slt, %7, %c2560_i32_3 : i32
    %12 = arith.extui %11 : i1 to i32
    %c0_i32_4 = arith.constant 0 : i32
    %13 = arith.cmpi ne, %12, %c0_i32_4 : i32
    scf.if %13 {
      %17 = tpu.iota {dimensions = array<i32: 0>} : vector<512x128xi32>
      %c0_i32_7 = arith.constant 0 : i32
      %c5_i32 = arith.constant 5 : i32
      %18 = arith.addi %c0_i32_7, %c5_i32 : i32
      %c1_i32_8 = arith.constant 1 : i32
      scf.for %arg7 = %c0_i32_7 to %18 step %c1_i32_8  : i32 {
        %c1_i32_10 = arith.constant 1 : i32
        %19 = arith.muli %arg7, %c1_i32_10 : i32
        %c0_i32_11 = arith.constant 0 : i32
        %20 = arith.addi %c0_i32_11, %19 : i32
        %c512_i32 = arith.constant 512 : i32
        %21 = arith.muli %20, %c512_i32 : i32
        %22 = tpu.assume_multiple %21, 512 : i32
        %23 = arith.index_cast %22 : i32 to index
        %c0_12 = arith.constant 0 : index
        %24 = vector.load %arg3[%23, %c0_12] : memref<2560x128xf32, #tpu.memory_space<vmem>>, vector<512x128xf32>
        %25 = arith.index_cast %22 : i32 to index
        %c0_13 = arith.constant 0 : index
        %26 = vector.load %arg4[%25, %c0_13] : memref<2560x128xf32, #tpu.memory_space<vmem>>, vector<512x128xf32>
        %27 = arith.subf %24, %26 : vector<512x128xf32>
        %28 = vector.broadcast %22 : i32 to vector<512x128xi32>
        %29 = arith.addi %17, %28 : vector<512x128xi32>
        %30 = vector.broadcast %7 : i32 to vector<512x128xi32>
        %31 = arith.cmpi slt, %29, %30 : vector<512x128xi32>
        %cst = arith.constant 0.000000e+00 : f32
        %32 = vector.broadcast %cst : f32 to vector<512x128xf32>
        %33 = arith.select %31, %27, %32 : vector<512x128xi1>, vector<512x128xf32>
        %c0_14 = arith.constant 0 : index
        %c0_15 = arith.constant 0 : index
        %34 = vector.load %arg6[%c0_14, %c0_15] : memref<8x128xf32, #tpu.memory_space<vmem>>, vector<8x128xf32>
        %35 = arith.mulf %33, %33 : vector<512x128xf32>
        %36 = vector.extract_strided_slice %35 {offsets = [0, 0], sizes = [256, 128], strides = [1, 1]} : vector<512x128xf32> to vector<256x128xf32>
        %37 = vector.extract_strided_slice %35 {offsets = [256, 0], sizes = [256, 128], strides = [1, 1]} : vector<512x128xf32> to vector<256x128xf32>
        %38 = arith.addf %36, %37 : vector<256x128xf32>
        %39 = vector.extract_strided_slice %38 {offsets = [0, 0], sizes = [128, 128], strides = [1, 1]} : vector<256x128xf32> to vector<128x128xf32>
        %40 = vector.extract_strided_slice %38 {offsets = [128, 0], sizes = [128, 128], strides = [1, 1]} : vector<256x128xf32> to vector<128x128xf32>
        %41 = arith.addf %39, %40 : vector<128x128xf32>
        %42 = vector.extract_strided_slice %41 {offsets = [0, 0], sizes = [64, 128], strides = [1, 1]} : vector<128x128xf32> to vector<64x128xf32>
        %43 = vector.extract_strided_slice %41 {offsets = [64, 0], sizes = [64, 128], strides = [1, 1]} : vector<128x128xf32> to vector<64x128xf32>
        %44 = arith.addf %42, %43 : vector<64x128xf32>
        %45 = vector.extract_strided_slice %44 {offsets = [0, 0], sizes = [32, 128], strides = [1, 1]} : vector<64x128xf32> to vector<32x128xf32>
        %46 = vector.extract_strided_slice %44 {offsets = [32, 0], sizes = [32, 128], strides = [1, 1]} : vector<64x128xf32> to vector<32x128xf32>
        %47 = arith.addf %45, %46 : vector<32x128xf32>
        %48 = vector.extract_strided_slice %47 {offsets = [0, 0], sizes = [16, 128], strides = [1, 1]} : vector<32x128xf32> to vector<16x128xf32>
        %49 = vector.extract_strided_slice %47 {offsets = [16, 0], sizes = [16, 128], strides = [1, 1]} : vector<32x128xf32> to vector<16x128xf32>
        %50 = arith.addf %48, %49 : vector<16x128xf32>
        %51 = vector.extract_strided_slice %50 {offsets = [0, 0], sizes = [8, 128], strides = [1, 1]} : vector<16x128xf32> to vector<8x128xf32>
        %52 = vector.extract_strided_slice %50 {offsets = [8, 0], sizes = [8, 128], strides = [1, 1]} : vector<16x128xf32> to vector<8x128xf32>
        %53 = arith.addf %51, %52 : vector<8x128xf32>
        %54 = arith.addf %34, %53 : vector<8x128xf32>
        %c0_16 = arith.constant 0 : index
        %c0_17 = arith.constant 0 : index
        %55 = vector.load %arg6[%c0_16, %c0_17] : memref<8x128xf32, #tpu.memory_space<vmem>>, vector<8x128xf32>
        tpu.vector_store %arg6[%c0_16, %c0_17], %54 {strides = array<i32>} : memref<8x128xf32, #tpu.memory_space<vmem>>, vector<8x128xf32>,
      }
      %c5_i32_9 = arith.constant 5 : i32
    } else {
    }
    %c0_i32_5 = arith.constant 0 : i32
    %14 = arith.cmpi eq, %arg1, %c0_i32_5 : i32
    %15 = arith.extui %14 : i1 to i32
    %c0_i32_6 = arith.constant 0 : i32
    %16 = arith.cmpi ne, %15, %c0_i32_6 : i32
    scf.if %16 {
      %c0_7 = arith.constant 0 : index
      %c0_8 = arith.constant 0 : index
      %17 = vector.load %arg6[%c0_7, %c0_8] : memref<8x128xf32, #tpu.memory_space<vmem>>, vector<8x128xf32>
      %18 = vector.shape_cast %17 : vector<8x128xf32> to vector<1x8x128xf32>
      %cst = arith.constant dense<0.000000e+00> : vector<1xf32>
      %19 = vector.multi_reduction <add>, %18, %cst [1, 2] : vector<1x8x128xf32> to vector<1xf32>
      %20 = vector.shape_cast %19 : vector<1xf32> to vector<1x1x1xf32>
      %21 = vector.extract %20[0, 0, 0] : f32 from vector<1x1x1xf32>
      %c0_9 = arith.constant 0 : index
      %c0_10 = arith.constant 0 : index
      %22 = memref.load %arg5[%c0_9, %c0_10] : memref<1x1xf32, #tpu.memory_space<smem>>
      memref.store %21, %arg5[%c0_9, %c0_10] : memref<1x1xf32, #tpu.memory_space<smem>>
    } else {
    }
    return
  }
  func.func @transform_0(%arg0: i32, %arg1: i32, %arg2: memref<1xi32, #tpu.memory_space<smem>>) -> (i32, i32) {
    %c1_i32 = arith.constant 1 : i32
    %0 = arith.muli %arg0, %c1_i32 : i32
    %1 = arith.addi %0, %arg1 : i32
    %c0_i32 = arith.constant 0 : i32
    %2 = arith.minsi %1, %c0_i32 : i32
    %c0_i32_0 = arith.constant 0 : i32
    %c0_i32_1 = arith.constant 0 : i32
    return %2, %c0_i32_0 : i32, i32
  }
  func.func @transform_1(%arg0: i32, %arg1: i32, %arg2: memref<1xi32, #tpu.memory_space<smem>>) -> (i32, i32) {
    %c1_i32 = arith.constant 1 : i32
    %0 = arith.muli %arg0, %c1_i32 : i32
    %1 = arith.addi %0, %arg1 : i32
    %c0_i32 = arith.constant 0 : i32
    %2 = arith.minsi %1, %c0_i32 : i32
    %c0_i32_0 = arith.constant 0 : i32
    %c0_i32_1 = arith.constant 0 : i32
    return %2, %c0_i32_0 : i32, i32
  }
  func.func @transform_2(%arg0: i32, %arg1: i32, %arg2: memref<1xi32, #tpu.memory_space<smem>>) -> (i32, i32) {
    %c0_i32 = arith.constant 0 : i32
    %c0_i32_0 = arith.constant 0 : i32
    return %arg0, %c0_i32 : i32, i32
  }
}

</mosaic_0001>

<llo_original>
// kernel: tpu_custom_call.1
$region0: #{tpu_custom_call.1}
  #allocation0 [shape = 'u32[]', space=smem, size = 0x4, offset = 0x4, fixed_abs, tag = 'smem constant byte address 0x4 - core index']
  #allocation1 [shape = 'u32[144,128]{1,0:T(1,128)}', space=vmem, size = 0x12000, scoped, tag = 'internal scratch']
  #allocation2 [shape = 'f32[8,128]{1,0:T(8,128)}', space=vmem, size = 0x1000, scoped, tag = 'scratch operand']
  #allocation3 [shape = 's32[1]{0}', space=sflag, size = 0x4, scoped, tag = 'scoped memory for tpu_custom_call.1']
  #allocation4 [shape = 's32[1]{0:T(128)S(6)}', space=smem, size = 0x200, scoped, tag = 'prefetched SMEM operand 0']
  %s0 = inlined_call_operand.<no memory space> [shape: s32[1], index: 0, kind: input, shape index: {}]
  %s1 = inlined_call_operand.hbm [shape: f32[2343,128], index: 1, kind: input, shape index: {}]
  %s2 = inlined_call_operand.hbm [shape: f32[2343,128], index: 2, kind: input, shape index: {}]
  %s3 = inlined_call_operand.hbm [shape: f32[1,1], index: 3, kind: output, shape index: {}]
  %s4 = sld [smem:[#allocation0]]
  $region56: #{tpu_custom_call.1} parent=0
    _
  %s6 = ssub.s32 1, %s4
  %s7 = scalar_select 0, %s6, %s4
  %8 = sst [smem:[#allocation4]] %s0
  $region1: #{tpu_custom_call.1} parent=0
    #allocation5 [shape = 'u8[1310720]{0}', space=vmem, size = 0x140000, scoped, tag = 'input window, operand 1, single buffered']
    #allocation6 [shape = 's32[1]{0}', space=sflag, size = 0x4, scoped, tag = 'scoped memory for tpu_custom_call.1']
    #allocation7 [shape = 's32[1]{0}', space=sflag, size = 0x4, scoped, tag = 'scoped memory for tpu_custom_call.1']
    #allocation8 [shape = 'u8[1310720]{0}', space=vmem, size = 0x140000, scoped, tag = 'input window, operand 2, single buffered']
    #allocation9 [shape = 's32[1]{0}', space=sflag, size = 0x4, scoped, tag = 'scoped memory for tpu_custom_call.1']
    #allocation10 [shape = 'u8[512]{0}', space=smem, size = 0x200, scoped, tag = 'output window, operand 0, single buffered']
    %9 = vsyncpa [#allocation6], 0
    %10 = vsyncpa [#allocation9], 0
    %11 = vsyncpa [#allocation7], 0
    // Predicated region
    $region2: #{tpu_custom_call.1} parent=1 // pred_check
      _
    $region3: #{tpu_custom_call.1} parent=1 // pred_check_branch
      %13 = sbr.rel (0) target = $region5
    $region4: #{tpu_custom_call.1} parent=1 // pred_region
      %s14 = sadd.s32 0, 0
      %p15 = scmp.lt.s32.totalorder %s14, 0
      %s16 = scalar_select %p15, %s14, 0
      %s17 = smul.u32 320, %s16
      %s18 = ssub.s32 293, %s17
      %s19 = smul.u32 128, %s18
      %s21 = ssub.s32 40960, %s19
      %22 = vsyncadd [#allocation6], %s21
      %p23 = scmp.ne.s32.totalorder 0, %s19
      %s24 = smul.addr %s17, 128
      %s25 = scalar_lea.hbm %s1, %s24
      %s26 = smul.u32 8, %s18
      %s27 = sshll.u32 [#allocation5], 4
      %s28 = int_to_ptr.vmem [resolvable:$true] %s27
      %s29 = sshll.u32 %s26, 4
      %33 = dma.hbm_to_vmem [thread:$0]  (%p23), %s25, %s29, %s28, [#allocation6], 128, 128, 8
    $region5: #{tpu_custom_call.1} parent=1 // pred_fallthru
      _
    // Predicated region
    $region6: #{tpu_custom_call.1} parent=1 // pred_check
      _
    $region7: #{tpu_custom_call.1} parent=1 // pred_check_branch
      %35 = sbr.rel (0) target = $region9
    $region8: #{tpu_custom_call.1} parent=1 // pred_region
      %s36 = sadd.s32 0, 0
      %p37 = scmp.lt.s32.totalorder %s36, 0
      %s38 = scalar_select %p37, %s36, 0
      %s39 = smul.u32 320, %s38
      %s40 = ssub.s32 293, %s39
      %s41 = smul.u32 128, %s40
      %s43 = ssub.s32 40960, %s41
      %44 = vsyncadd [#allocation9], %s43
      %p45 = scmp.ne.s32.totalorder 0, %s41
      %s46 = smul.addr %s39, 128
      %s47 = scalar_lea.hbm %s2, %s46
      %s48 = smul.u32 8, %s40
      %s49 = sshll.u32 [#allocation8], 4
      %s50 = int_to_ptr.vmem [resolvable:$true] %s49
      %s51 = sshll.u32 %s48, 4
      %55 = dma.hbm_to_vmem [thread:$0]  (%p45), %s47, %s51, %s50, [#allocation9], 128, 128, 8
    $region9: #{tpu_custom_call.1} parent=1 // pred_fallthru
      _
    // Predicated region
    $region10: #{tpu_custom_call.1} parent=1 // pred_check
      _
    $region11: #{tpu_custom_call.1} parent=1 // pred_check_branch
      %57 = sbr.rel (0) target = $region13
    $region12: #{tpu_custom_call.1} parent=1 // pred_region
      %58 = dma.done [#allocation6], 40960
    $region13: #{tpu_custom_call.1} parent=1 // pred_fallthru
      _
    // Predicated region
    $region14: #{tpu_custom_call.1} parent=1 // pred_check
      _
    $region15: #{tpu_custom_call.1} parent=1 // pred_check_branch
      %60 = sbr.rel (0) target = $region17
    $region16: #{tpu_custom_call.1} parent=1 // pred_region
      %61 = dma.done [#allocation9], 40960
    $region17: #{tpu_custom_call.1} parent=1 // pred_fallthru
      _
    %s62 = sadd.s32 0, 0
    %p63 = scmp.lt.s32.totalorder %s62, 0
    %s64 = scalar_select %p63, %s62, 0
    %s65 = smul.u32 320, %s64
    %s66 = ssub.s32 293, %s65
    %s67 = smul.u32 128, %s66
    %s68 = sadd.s32 0, 0
    %p69 = scmp.lt.s32.totalorder %s68, 0
    %s70 = scalar_select %p69, %s68, 0
    %s71 = smul.u32 320, %s70
    %s72 = ssub.s32 293, %s71
    %s73 = smul.u32 128, %s72
    %p74 = scmp.eq.s32.totalorder 0, 0
    // Predicated region
    $region18: #{tpu_custom_call.1} parent=1 // pred_check
      %p75 = pneg %p74
    $region19: #{tpu_custom_call.1} parent=1 // pred_check_branch
      %77 = sbr.rel (%p75) target = $region21
    $region20: #{tpu_custom_call.1} parent=1 // pred_region
      %78 = vst [vmem:[#allocation2] sm:$0xff] 0.0
    $region21: #{tpu_custom_call.1} parent=1 // pred_fallthru
      _
    %s79 = sadd.s32 0, 0
    %s80 = smul.u32 %s79, 2560
    %s81 = sld [smem:[#allocation4]]
    %s82 = ssub.s32 %s81, %s80
    %p83 = scmp.ge.s32.totalorder %s82, 2560
    // Predicated region
    $region22: #{tpu_custom_call.1} parent=1 // pred_check
      %p84 = pneg %p83
    $region23: #{tpu_custom_call.1} parent=1 // pred_check_branch
      %86 = sbr.rel (%p84) target = $region25
    $region24: #{tpu_custom_call.1} parent=1 // pred_region
      loop: start=0, step=1, limit=5
      $region26: #{tpu_custom_call.1} parent=24 // loop_pre_header
        _
      $region27: #{tpu_custom_call.1} parent=24 // loop_header
        %s88 = sphi 0, %s92
        %p89 = scmp.ge.s32.totalorder %s88, 5
      $region28: #{tpu_custom_call.1} parent=24 // loop_header_branch
        %91 = sbr.rel (%p89) target = $region32
      $region29: #{tpu_custom_call.1} parent=24 // loop_body
        %s93 = smul.u32 %s88, 512
        %s94 = scalar_lea.vmem [#allocation5], %s93
        %v95 = vld [vmem:[%s94] sm:$0xff]
        %v96 = vld [vmem:[%s94 + $0x8] sm:$0xff]
        %v97 = vld [vmem:[%s94 + $0x10] sm:$0xff]
        %v98 = vld [vmem:[%s94 + $0x18] sm:$0xff]
        %v99 = vld [vmem:[%s94 + $0x20] sm:$0xff]
        %v100 = vld [vmem:[%s94 + $0x28] sm:$0xff]
        %v101 = vld [vmem:[%s94 + $0x30] sm:$0xff]
        %v102 = vld [vmem:[%s94 + $0x38] sm:$0xff]
        %v103 = vld [vmem:[%s94 + $0x40] sm:$0xff]
        %v104 = vld [vmem:[%s94 + $0x48] sm:$0xff]
        %v105 = vld [vmem:[%s94 + $0x50] sm:$0xff]
        %v106 = vld [vmem:[%s94 + $0x58] sm:$0xff]
        %v107 = vld [vmem:[%s94 + $0x60] sm:$0xff]
        %v108 = vld [vmem:[%s94 + $0x68] sm:$0xff]
        %v109 = vld [vmem:[%s94 + $0x70] sm:$0xff]
        %v110 = vld [vmem:[%s94 + $0x78] sm:$0xff]
        %v111 = vld [vmem:[%s94 + $0x80] sm:$0xff]
        %v112 = vld [vmem:[%s94 + $0x88] sm:$0xff]
        %v113 = vld [vmem:[%s94 + $0x90] sm:$0xff]
        %v114 = vld [vmem:[%s94 + $0x98] sm:$0xff]
        %v115 = vld [vmem:[%s94 + $0xa0] sm:$0xff]
        %v116 = vld [vmem:[%s94 + $0xa8] sm:$0xff]
        %v117 = vld [vmem:[%s94 + $0xb0] sm:$0xff]
        %v118 = vld [vmem:[%s94 + $0xb8] sm:$0xff]
        %v119 = vld [vmem:[%s94 + $0xc0] sm:$0xff]
        %v120 = vld [vmem:[%s94 + $0xc8] sm:$0xff]
        %v121 = vld [vmem:[%s94 + $0xd0] sm:$0xff]
        %v122 = vld [vmem:[%s94 + $0xd8] sm:$0xff]
        %v123 = vld [vmem:[%s94 + $0xe0] sm:$0xff]
        %v124 = vld [vmem:[%s94 + $0xe8] sm:$0xff]
        %v125 = vld [vmem:[%s94 + $0xf0] sm:$0xff]
        %v126 = vld [vmem:[%s94 + $0xf8] sm:$0xff]
        %v127 = vld [vmem:[%s94 + $0x100] sm:$0xff]
        %v128 = vld [vmem:[%s94 + $0x108] sm:$0xff]
        %v129 = vld [vmem:[%s94 + $0x110] sm:$0xff]
        %v130 = vld [vmem:[%s94 + $0x118] sm:$0xff]
        %v131 = vld [vmem:[%s94 + $0x120] sm:$0xff]
        %v132 = vld [vmem:[%s94 + $0x128] sm:$0xff]
        %v133 = vld [vmem:[%s94 + $0x130] sm:$0xff]
        %v134 = vld [vmem:[%s94 + $0x138] sm:$0xff]
        %v135 = vld [vmem:[%s94 + $0x140] sm:$0xff]
        %v136 = vld [vmem:[%s94 + $0x148] sm:$0xff]
        %v137 = vld [vmem:[%s94 + $0x150] sm:$0xff]
        %v138 = vld [vmem:[%s94 + $0x158] sm:$0xff]
        %v139 = vld [vmem:[%s94 + $0x160] sm:$0xff]
        %v140 = vld [vmem:[%s94 + $0x168] sm:$0xff]
        %v141 = vld [vmem:[%s94 + $0x170] sm:$0xff]
        %v142 = vld [vmem:[%s94 + $0x178] sm:$0xff]
        %v143 = vld [vmem:[%s94 + $0x180] sm:$0xff]
        %v144 = vld [vmem:[%s94 + $0x188] sm:$0xff]
        %v145 = vld [vmem:[%s94 + $0x190] sm:$0xff]
        %v146 = vld [vmem:[%s94 + $0x198] sm:$0xff]
        %v147 = vld [vmem:[%s94 + $0x1a0] sm:$0xff]
        %v148 = vld [vmem:[%s94 + $0x1a8] sm:$0xff]
        %v149 = vld [vmem:[%s94 + $0x1b0] sm:$0xff]
        %v150 = vld [vmem:[%s94 + $0x1b8] sm:$0xff]
        %v151 = vld [vmem:[%s94 + $0x1c0] sm:$0xff]
        %v152 = vld [vmem:[%s94 + $0x1c8] sm:$0xff]
        %v153 = vld [vmem:[%s94 + $0x1d0] sm:$0xff]
        %v154 = vld [vmem:[%s94 + $0x1d8] sm:$0xff]
        %v155 = vld [vmem:[%s94 + $0x1e0] sm:$0xff]
        %v156 = vld [vmem:[%s94 + $0x1e8] sm:$0xff]
        %v157 = vld [vmem:[%s94 + $0x1f0] sm:$0xff]
        %v158 = vld [vmem:[%s94 + $0x1f8] sm:$0xff]
        %s159 = scalar_lea.vmem [#allocation8], %s93
        %v160 = vld [vmem:[%s159] sm:$0xff]
        %v161 = vld [vmem:[%s159 + $0x8] sm:$0xff]
        %v162 = vld [vmem:[%s159 + $0x10] sm:$0xff]
        %v163 = vld [vmem:[%s159 + $0x18] sm:$0xff]
        %v164 = vld [vmem:[%s159 + $0x20] sm:$0xff]
        %v165 = vld [vmem:[%s159 + $0x28] sm:$0xff]
        %v166 = vld [vmem:[%s159 + $0x30] sm:$0xff]
        %v167 = vld [vmem:[%s159 + $0x38] sm:$0xff]
        %v168 = vld [vmem:[%s159 + $0x40] sm:$0xff]
        %v169 = vld [vmem:[%s159 + $0x48] sm:$0xff]
        %v170 = vld [vmem:[%s159 + $0x50] sm:$0xff]
        %v171 = vld [vmem:[%s159 + $0x58] sm:$0xff]
        %v172 = vld [vmem:[%s159 + $0x60] sm:$0xff]
        %v173 = vld [vmem:[%s159 + $0x68] sm:$0xff]
        %v174 = vld [vmem:[%s159 + $0x70] sm:$0xff]
        %v175 = vld [vmem:[%s159 + $0x78] sm:$0xff]
        %v176 = vld [vmem:[%s159 + $0x80] sm:$0xff]
        %v177 = vld [vmem:[%s159 + $0x88] sm:$0xff]
        %v178 = vld [vmem:[%s159 + $0x90] sm:$0xff]
        %v179 = vld [vmem:[%s159 + $0x98] sm:$0xff]
        %v180 = vld [vmem:[%s159 + $0xa0] sm:$0xff]
        %v181 = vld [vmem:[%s159 + $0xa8] sm:$0xff]
        %v182 = vld [vmem:[%s159 + $0xb0] sm:$0xff]
        %v183 = vld [vmem:[%s159 + $0xb8] sm:$0xff]
        %v184 = vld [vmem:[%s159 + $0xc0] sm:$0xff]
        %v185 = vld [vmem:[%s159 + $0xc8] sm:$0xff]
        %v186 = vld [vmem:[%s159 + $0xd0] sm:$0xff]
        %v187 = vld [vmem:[%s159 + $0xd8] sm:$0xff]
        %v188 = vld [vmem:[%s159 + $0xe0] sm:$0xff]
        %v189 = vld [vmem:[%s159 + $0xe8] sm:$0xff]
        %v190 = vld [vmem:[%s159 + $0xf0] sm:$0xff]
        %v191 = vld [vmem:[%s159 + $0xf8] sm:$0xff]
        %v192 = vld [vmem:[%s159 + $0x100] sm:$0xff]
        %v193 = vld [vmem:[%s159 + $0x108] sm:$0xff]
        %v194 = vld [vmem:[%s159 + $0x110] sm:$0xff]
        %v195 = vld [vmem:[%s159 + $0x118] sm:$0xff]
        %v196 = vld [vmem:[%s159 + $0x120] sm:$0xff]
        %v197 = vld [vmem:[%s159 + $0x128] sm:$0xff]
        %v198 = vld [vmem:[%s159 + $0x130] sm:$0xff]
        %v199 = vld [vmem:[%s159 + $0x138] sm:$0xff]
        %v200 = vld [vmem:[%s159 + $0x140] sm:$0xff]
        %v201 = vld [vmem:[%s159 + $0x148] sm:$0xff]
        %v202 = vld [vmem:[%s159 + $0x150] sm:$0xff]
        %v203 = vld [vmem:[%s159 + $0x158] sm:$0xff]
        %v204 = vld [vmem:[%s159 + $0x160] sm:$0xff]
        %v205 = vld [vmem:[%s159 + $0x168] sm:$0xff]
        %v206 = vld [vmem:[%s159 + $0x170] sm:$0xff]
        %v207 = vld [vmem:[%s159 + $0x178] sm:$0xff]
        %v208 = vld [vmem:[%s159 + $0x180] sm:$0xff]
        %v209 = vld [vmem:[%s159 + $0x188] sm:$0xff]
        %v210 = vld [vmem:[%s159 + $0x190] sm:$0xff]
        %v211 = vld [vmem:[%s159 + $0x198] sm:$0xff]
        %v212 = vld [vmem:[%s159 + $0x1a0] sm:$0xff]
        %v213 = vld [vmem:[%s159 + $0x1a8] sm:$0xff]
        %v214 = vld [vmem:[%s159 + $0x1b0] sm:$0xff]
        %v215 = vld [vmem:[%s159 + $0x1b8] sm:$0xff]
        %v216 = vld [vmem:[%s159 + $0x1c0] sm:$0xff]
        %v217 = vld [vmem:[%s159 + $0x1c8] sm:$0xff]
        %v218 = vld [vmem:[%s159 + $0x1d0] sm:$0xff]
        %v219 = vld [vmem:[%s159 + $0x1d8] sm:$0xff]
        %v220 = vld [vmem:[%s159 + $0x1e0] sm:$0xff]
        %v221 = vld [vmem:[%s159 + $0x1e8] sm:$0xff]
        %v222 = vld [vmem:[%s159 + $0x1f0] sm:$0xff]
        %v223 = vld [vmem:[%s159 + $0x1f8] sm:$0xff]
        %v224 = vsub.f32 %v95, %v160
        %v225 = vsub.f32 %v96, %v161
        %v226 = vsub.f32 %v97, %v162
        %v227 = vsub.f32 %v98, %v163
        %v228 = vsub.f32 %v99, %v164
        %v229 = vsub.f32 %v100, %v165
        %v230 = vsub.f32 %v101, %v166
        %v231 = vsub.f32 %v102, %v167
        %v232 = vsub.f32 %v103, %v168
        %v233 = vsub.f32 %v104, %v169
        %v234 = vsub.f32 %v105, %v170
        %v235 = vsub.f32 %v106, %v171
        %v236 = vsub.f32 %v107, %v172
        %v237 = vsub.f32 %v108, %v173
        %v238 = vsub.f32 %v109, %v174
        %v239 = vsub.f32 %v110, %v175
        %v240 = vsub.f32 %v111, %v176
        %v241 = vsub.f32 %v112, %v177
        %v242 = vsub.f32 %v113, %v178
        %v243 = vsub.f32 %v114, %v179
        %v244 = vsub.f32 %v115, %v180
        %v245 = vsub.f32 %v116, %v181
        %v246 = vsub.f32 %v117, %v182
        %v247 = vsub.f32 %v118, %v183
        %v248 = vsub.f32 %v119, %v184
        %v249 = vsub.f32 %v120, %v185
        %v250 = vsub.f32 %v121, %v186
        %v251 = vsub.f32 %v122, %v187
        %v252 = vsub.f32 %v123, %v188
        %v253 = vsub.f32 %v124, %v189
        %v254 = vsub.f32 %v125, %v190
        %v255 = vsub.f32 %v126, %v191
        %v256 = vsub.f32 %v127, %v192
        %v257 = vsub.f32 %v128, %v193
        %v258 = vsub.f32 %v129, %v194
        %v259 = vsub.f32 %v130, %v195
        %v260 = vsub.f32 %v131, %v196
        %v261 = vsub.f32 %v132, %v197
        %v262 = vsub.f32 %v133, %v198
        %v263 = vsub.f32 %v134, %v199
        %v264 = vsub.f32 %v135, %v200
        %v265 = vsub.f32 %v136, %v201
        %v266 = vsub.f32 %v137, %v202
        %v267 = vsub.f32 %v138, %v203
        %v268 = vsub.f32 %v139, %v204
        %v269 = vsub.f32 %v140, %v205
        %v270 = vsub.f32 %v141, %v206
        %v271 = vsub.f32 %v142, %v207
        %v272 = vsub.f32 %v143, %v208
        %v273 = vsub.f32 %v144, %v209
        %v274 = vsub.f32 %v145, %v210
        %v275 = vsub.f32 %v146, %v211
        %v276 = vsub.f32 %v147, %v212
        %v277 = vsub.f32 %v148, %v213
        %v278 = vsub.f32 %v149, %v214
        %v279 = vsub.f32 %v150, %v215
        %v280 = vsub.f32 %v151, %v216
        %v281 = vsub.f32 %v152, %v217
        %v282 = vsub.f32 %v153, %v218
        %v283 = vsub.f32 %v154, %v219
        %v284 = vsub.f32 %v155, %v220
        %v285 = vsub.f32 %v156, %v221
        %v286 = vsub.f32 %v157, %v222
        %v287 = vsub.f32 %v158, %v223
        %v288 = vld [vmem:[#allocation2] sm:$0xff]
        %v289 = vmul.f32 %v224, %v224
        %v290 = vmul.f32 %v225, %v225
        %v291 = vmul.f32 %v226, %v226
        %v292 = vmul.f32 %v227, %v227
        %v293 = vmul.f32 %v228, %v228
        %v294 = vmul.f32 %v229, %v229
        %v295 = vmul.f32 %v230, %v230
        %v296 = vmul.f32 %v231, %v231
        %v297 = vmul.f32 %v232, %v232
        %v298 = vmul.f32 %v233, %v233
        %v299 = vmul.f32 %v234, %v234
        %v300 = vmul.f32 %v235, %v235
        %v301 = vmul.f32 %v236, %v236
        %v302 = vmul.f32 %v237, %v237
        %v303 = vmul.f32 %v238, %v238
        %v304 = vmul.f32 %v239, %v239
        %v305 = vmul.f32 %v240, %v240
        %v306 = vmul.f32 %v241, %v241
        %v307 = vmul.f32 %v242, %v242
        %v308 = vmul.f32 %v243, %v243
        %v309 = vmul.f32 %v244, %v244
        %v310 = vmul.f32 %v245, %v245
        %v311 = vmul.f32 %v246, %v246
        %v312 = vmul.f32 %v247, %v247
        %v313 = vmul.f32 %v248, %v248
        %v314 = vmul.f32 %v249, %v249
        %v315 = vmul.f32 %v250, %v250
        %v316 = vmul.f32 %v251, %v251
        %v317 = vmul.f32 %v252, %v252
        %v318 = vmul.f32 %v253, %v253
        %v319 = vmul.f32 %v254, %v254
        %v320 = vmul.f32 %v255, %v255
        %v321 = vmul.f32 %v256, %v256
        %v322 = vmul.f32 %v257, %v257
        %v323 = vmul.f32 %v258, %v258
        %v324 = vmul.f32 %v259, %v259
        %v325 = vmul.f32 %v260, %v260
        %v326 = vmul.f32 %v261, %v261
        %v327 = vmul.f32 %v262, %v262
        %v328 = vmul.f32 %v263, %v263
        %v329 = vmul.f32 %v264, %v264
        %v330 = vmul.f32 %v265, %v265
        %v331 = vmul.f32 %v266, %v266
        %v332 = vmul.f32 %v267, %v267
        %v333 = vmul.f32 %v268, %v268
        %v334 = vmul.f32 %v269, %v269
        %v335 = vmul.f32 %v270, %v270
        %v336 = vmul.f32 %v271, %v271
        %v337 = vmul.f32 %v272, %v272
        %v338 = vmul.f32 %v273, %v273
        %v339 = vmul.f32 %v274, %v274
        %v340 = vmul.f32 %v275, %v275
        %v341 = vmul.f32 %v276, %v276
        %v342 = vmul.f32 %v277, %v277
        %v343 = vmul.f32 %v278, %v278
        %v344 = vmul.f32 %v279, %v279
        %v345 = vmul.f32 %v280, %v280
        %v346 = vmul.f32 %v281, %v281
        %v347 = vmul.f32 %v282, %v282
        %v348 = vmul.f32 %v283, %v283
        %v349 = vmul.f32 %v284, %v284
        %v350 = vmul.f32 %v285, %v285
        %v351 = vmul.f32 %v286, %v286
        %v352 = vmul.f32 %v287, %v287
        %v353 = vadd.f32 %v289, %v321
        %v354 = vadd.f32 %v290, %v322
        %v355 = vadd.f32 %v291, %v323
        %v356 = vadd.f32 %v292, %v324
        %v357 = vadd.f32 %v293, %v325
        %v358 = vadd.f32 %v294, %v326
        %v359 = vadd.f32 %v295, %v327
        %v360 = vadd.f32 %v296, %v328
        %v361 = vadd.f32 %v297, %v329
        %v362 = vadd.f32 %v298, %v330
        %v363 = vadd.f32 %v299, %v331
        %v364 = vadd.f32 %v300, %v332
        %v365 = vadd.f32 %v301, %v333
        %v366 = vadd.f32 %v302, %v334
        %v367 = vadd.f32 %v303, %v335
        %v368 = vadd.f32 %v304, %v336
        %v369 = vadd.f32 %v305, %v337
        %v370 = vadd.f32 %v306, %v338
        %v371 = vadd.f32 %v307, %v339
        %v372 = vadd.f32 %v308, %v340
        %v373 = vadd.f32 %v309, %v341
        %v374 = vadd.f32 %v310, %v342
        %v375 = vadd.f32 %v311, %v343
        %v376 = vadd.f32 %v312, %v344
        %v377 = vadd.f32 %v313, %v345
        %v378 = vadd.f32 %v314, %v346
        %v379 = vadd.f32 %v315, %v347
        %v380 = vadd.f32 %v316, %v348
        %v381 = vadd.f32 %v317, %v349
        %v382 = vadd.f32 %v318, %v350
        %v383 = vadd.f32 %v319, %v351
        %v384 = vadd.f32 %v320, %v352
        %v385 = vadd.f32 %v353, %v369
        %v386 = vadd.f32 %v354, %v370
        %v387 = vadd.f32 %v355, %v371
        %v388 = vadd.f32 %v356, %v372
        %v389 = vadd.f32 %v357, %v373
        %v390 = vadd.f32 %v358, %v374
        %v391 = vadd.f32 %v359, %v375
        %v392 = vadd.f32 %v360, %v376
        %v393 = vadd.f32 %v361, %v377
        %v394 = vadd.f32 %v362, %v378
        %v395 = vadd.f32 %v363, %v379
        %v396 = vadd.f32 %v364, %v380
        %v397 = vadd.f32 %v365, %v381
        %v398 = vadd.f32 %v366, %v382
        %v399 = vadd.f32 %v367, %v383
        %v400 = vadd.f32 %v368, %v384
        %v401 = vadd.f32 %v385, %v393
        %v402 = vadd.f32 %v386, %v394
        %v403 = vadd.f32 %v387, %v395
        %v404 = vadd.f32 %v388, %v396
        %v405 = vadd.f32 %v389, %v397
        %v406 = vadd.f32 %v390, %v398
        %v407 = vadd.f32 %v391, %v399
        %v408 = vadd.f32 %v392, %v400
        %v409 = vadd.f32 %v401, %v405
        %v410 = vadd.f32 %v402, %v406
        %v411 = vadd.f32 %v403, %v407
        %v412 = vadd.f32 %v404, %v408
        %v413 = vadd.f32 %v409, %v411
        %v414 = vadd.f32 %v410, %v412
        %v415 = vadd.f32 %v413, %v414
        %v416 = vadd.f32 %v288, %v415
        %417 = vst [vmem:[#allocation2] sm:$0xff] %v416
      $region30: #{tpu_custom_call.1} parent=24 // loop_footer
        %s92 = sadd.s32 1, %s88
      $region31: #{tpu_custom_call.1} parent=24 // loop_footer_branch
        %87 = sbr.rel target = $region27
      $region32: #{tpu_custom_call.1} parent=24 // loop_exit
        _
    $region25: #{tpu_custom_call.1} parent=1 // pred_fallthru
      _
    %p418 = scmp.lt.s32.totalorder %s82, 2560
    // Predicated region
    $region33: #{tpu_custom_call.1} parent=1 // pred_check
      %p419 = pneg %p418
    $region34: #{tpu_custom_call.1} parent=1 // pred_check_branch
      %421 = sbr.rel (%p419) target = $region36
    $region35: #{tpu_custom_call.1} parent=1 // pred_region
      %v422 = vlaneseq
      %v423 = vshrl.u32 %v422, 7
      %v424 = vadd.s32 %v423, 8
      %v425 = vadd.s32 %v423, 16
      %v426 = vadd.s32 %v423, 24
      %v427 = vadd.s32 %v423, 32
      %v428 = vadd.s32 %v423, 40
      %v429 = vadd.s32 %v423, 48
      %v430 = vadd.s32 %v423, 56
      %v431 = vadd.s32 %v423, 64
      %v432 = vadd.s32 %v423, 72
      %v433 = vadd.s32 %v423, 80
      %v434 = vadd.s32 %v423, 88
      %v435 = vadd.s32 %v423, 96
      %v436 = vadd.s32 %v423, 104
      %v437 = vadd.s32 %v423, 112
      %v438 = vadd.s32 %v423, 120
      %v439 = vadd.s32 %v423, 128
      %v440 = vadd.s32 %v423, 136
      %v441 = vadd.s32 %v423, 144
      %v442 = vadd.s32 %v423, 152
      %v443 = vadd.s32 %v423, 160
      %v444 = vadd.s32 %v423, 168
      %v445 = vadd.s32 %v423, 176
      %v446 = vadd.s32 %v423, 184
      %v447 = vadd.s32 %v423, 192
      %v448 = vadd.s32 %v423, 200
      %v449 = vadd.s32 %v423, 208
      %v450 = vadd.s32 %v423, 216
      %v451 = vadd.s32 %v423, 224
      %v452 = vadd.s32 %v423, 232
      %v453 = vadd.s32 %v423, 240
      %v454 = vadd.s32 %v423, 248
      %v455 = vadd.s32 %v423, 256
      %v456 = vadd.s32 %v423, 264
      %v457 = vadd.s32 %v423, 272
      %v458 = vadd.s32 %v423, 280
      %v459 = vadd.s32 %v423, 288
      %v460 = vadd.s32 %v423, 296
      %v461 = vadd.s32 %v423, 304
      %v462 = vadd.s32 %v423, 312
      %v463 = vadd.s32 %v423, 320
      %v464 = vadd.s32 %v423, 328
      %v465 = vadd.s32 %v423, 336
      %v466 = vadd.s32 %v423, 344
      %v467 = vadd.s32 %v423, 352
      %v468 = vadd.s32 %v423, 360
      %v469 = vadd.s32 %v423, 368
      %v470 = vadd.s32 %v423, 376
      %v471 = vadd.s32 %v423, 384
      %v472 = vadd.s32 %v423, 392
      %v473 = vadd.s32 %v423, 400
      %v474 = vadd.s32 %v423, 408
      %v475 = vadd.s32 %v423, 416
      %v476 = vadd.s32 %v423, 424
      %v477 = vadd.s32 %v423, 432
      %v478 = vadd.s32 %v423, 440
      %v479 = vadd.s32 %v423, 448
      %v480 = vadd.s32 %v423, 456
      %v481 = vadd.s32 %v423, 464
      %v482 = vadd.s32 %v423, 472
      %v483 = vadd.s32 %v423, 480
      %v484 = vadd.s32 %v423, 488
      %v485 = vadd.s32 %v423, 496
      %v486 = vadd.s32 %v423, 504
      loop: start=0, step=1, limit=5
      $region37: #{tpu_custom_call.1} parent=35 // loop_pre_header
        _
      $region38: #{tpu_custom_call.1} parent=35 // loop_header
        %s488 = sphi 0, %s492
        %p489 = scmp.ge.s32.totalorder %s488, 5
      $region39: #{tpu_custom_call.1} parent=35 // loop_header_branch
        %491 = sbr.rel (%p489) target = $region43
      $region40: #{tpu_custom_call.1} parent=35 // loop_body
        %s493 = smul.u32 %s488, 512
        %s494 = scalar_lea.vmem [#allocation5], %s493
        %v495 = vld [vmem:[%s494] sm:$0xff]
        %v496 = vld [vmem:[%s494 + $0x8] sm:$0xff]
        %v497 = vld [vmem:[%s494 + $0x10] sm:$0xff]
        %v498 = vld [vmem:[%s494 + $0x18] sm:$0xff]
        %v499 = vld [vmem:[%s494 + $0x20] sm:$0xff]
        %v500 = vld [vmem:[%s494 + $0x28] sm:$0xff]
        %v501 = vld [vmem:[%s494 + $0x30] sm:$0xff]
        %v502 = vld [vmem:[%s494 + $0x38] sm:$0xff]
        %v503 = vld [vmem:[%s494 + $0x40] sm:$0xff]
        %v504 = vld [vmem:[%s494 + $0x48] sm:$0xff]
        %v505 = vld [vmem:[%s494 + $0x50] sm:$0xff]
        %v506 = vld [vmem:[%s494 + $0x58] sm:$0xff]
        %v507 = vld [vmem:[%s494 + $0x60] sm:$0xff]
        %v508 = vld [vmem:[%s494 + $0x68] sm:$0xff]
        %v509 = vld [vmem:[%s494 + $0x70] sm:$0xff]
        %v510 = vld [vmem:[%s494 + $0x78] sm:$0xff]
        %v511 = vld [vmem:[%s494 + $0x80] sm:$0xff]
        %v512 = vld [vmem:[%s494 + $0x88] sm:$0xff]
        %v513 = vld [vmem:[%s494 + $0x90] sm:$0xff]
        %v514 = vld [vmem:[%s494 + $0x98] sm:$0xff]
        %v515 = vld [vmem:[%s494 + $0xa0] sm:$0xff]
        %v516 = vld [vmem:[%s494 + $0xa8] sm:$0xff]
        %v517 = vld [vmem:[%s494 + $0xb0] sm:$0xff]
        %v518 = vld [vmem:[%s494 + $0xb8] sm:$0xff]
        %v519 = vld [vmem:[%s494 + $0xc0] sm:$0xff]
        %v520 = vld [vmem:[%s494 + $0xc8] sm:$0xff]
        %v521 = vld [vmem:[%s494 + $0xd0] sm:$0xff]
        %v522 = vld [vmem:[%s494 + $0xd8] sm:$0xff]
        %v523 = vld [vmem:[%s494 + $0xe0] sm:$0xff]
        %v524 = vld [vmem:[%s494 + $0xe8] sm:$0xff]
        %v525 = vld [vmem:[%s494 + $0xf0] sm:$0xff]
        %v526 = vld [vmem:[%s494 + $0xf8] sm:$0xff]
        %v527 = vld [vmem:[%s494 + $0x100] sm:$0xff]
        %v528 = vld [vmem:[%s494 + $0x108] sm:$0xff]
        %v529 = vld [vmem:[%s494 + $0x110] sm:$0xff]
        %v530 = vld [vmem:[%s494 + $0x118] sm:$0xff]
        %v531 = vld [vmem:[%s494 + $0x120] sm:$0xff]
        %v532 = vld [vmem:[%s494 + $0x128] sm:$0xff]
        %v533 = vld [vmem:[%s494 + $0x130] sm:$0xff]
        %v534 = vld [vmem:[%s494 + $0x138] sm:$0xff]
        %v535 = vld [vmem:[%s494 + $0x140] sm:$0xff]
        %v536 = vld [vmem:[%s494 + $0x148] sm:$0xff]
        %v537 = vld [vmem:[%s494 + $0x150] sm:$0xff]
        %v538 = vld [vmem:[%s494 + $0x158] sm:$0xff]
        %v539 = vld [vmem:[%s494 + $0x160] sm:$0xff]
        %v540 = vld [vmem:[%s494 + $0x168] sm:$0xff]
        %v541 = vld [vmem:[%s494 + $0x170] sm:$0xff]
        %v542 = vld [vmem:[%s494 + $0x178] sm:$0xff]
        %v543 = vld [vmem:[%s494 + $0x180] sm:$0xff]
        %v544 = vld [vmem:[%s494 + $0x188] sm:$0xff]
        %v545 = vld [vmem:[%s494 + $0x190] sm:$0xff]
        %v546 = vld [vmem:[%s494 + $0x198] sm:$0xff]
        %v547 = vld [vmem:[%s494 + $0x1a0] sm:$0xff]
        %v548 = vld [vmem:[%s494 + $0x1a8] sm:$0xff]
        %v549 = vld [vmem:[%s494 + $0x1b0] sm:$0xff]
        %v550 = vld [vmem:[%s494 + $0x1b8] sm:$0xff]
        %v551 = vld [vmem:[%s494 + $0x1c0] sm:$0xff]
        %v552 = vld [vmem:[%s494 + $0x1c8] sm:$0xff]
        %v553 = vld [vmem:[%s494 + $0x1d0] sm:$0xff]
        %v554 = vld [vmem:[%s494 + $0x1d8] sm:$0xff]
        %v555 = vld [vmem:[%s494 + $0x1e0] sm:$0xff]
        %v556 = vld [vmem:[%s494 + $0x1e8] sm:$0xff]
        %v557 = vld [vmem:[%s494 + $0x1f0] sm:$0xff]
        %v558 = vld [vmem:[%s494 + $0x1f8] sm:$0xff]
        %s559 = scalar_lea.vmem [#allocation8], %s493
        %v560 = vld [vmem:[%s559] sm:$0xff]
        %v561 = vld [vmem:[%s559 + $0x8] sm:$0xff]
        %v562 = vld [vmem:[%s559 + $0x10] sm:$0xff]
        %v563 = vld [vmem:[%s559 + $0x18] sm:$0xff]
        %v564 = vld [vmem:[%s559 + $0x20] sm:$0xff]
        %v565 = vld [vmem:[%s559 + $0x28] sm:$0xff]
        %v566 = vld [vmem:[%s559 + $0x30] sm:$0xff]
        %v567 = vld [vmem:[%s559 + $0x38] sm:$0xff]
        %v568 = vld [vmem:[%s559 + $0x40] sm:$0xff]
        %v569 = vld [vmem:[%s559 + $0x48] sm:$0xff]
        %v570 = vld [vmem:[%s559 + $0x50] sm:$0xff]
        %v571 = vld [vmem:[%s559 + $0x58] sm:$0xff]
        %v572 = vld [vmem:[%s559 + $0x60] sm:$0xff]
        %v573 = vld [vmem:[%s559 + $0x68] sm:$0xff]
        %v574 = vld [vmem:[%s559 + $0x70] sm:$0xff]
        %v575 = vld [vmem:[%s559 + $0x78] sm:$0xff]
        %v576 = vld [vmem:[%s559 + $0x80] sm:$0xff]
        %v577 = vld [vmem:[%s559 + $0x88] sm:$0xff]
        %v578 = vld [vmem:[%s559 + $0x90] sm:$0xff]
        %v579 = vld [vmem:[%s559 + $0x98] sm:$0xff]
        %v580 = vld [vmem:[%s559 + $0xa0] sm:$0xff]
        %v581 = vld [vmem:[%s559 + $0xa8] sm:$0xff]
        %v582 = vld [vmem:[%s559 + $0xb0] sm:$0xff]
        %v583 = vld [vmem:[%s559 + $0xb8] sm:$0xff]
        %v584 = vld [vmem:[%s559 + $0xc0] sm:$0xff]
        %v585 = vld [vmem:[%s559 + $0xc8] sm:$0xff]
        %v586 = vld [vmem:[%s559 + $0xd0] sm:$0xff]
        %v587 = vld [vmem:[%s559 + $0xd8] sm:$0xff]
        %v588 = vld [vmem:[%s559 + $0xe0] sm:$0xff]
        %v589 = vld [vmem:[%s559 + $0xe8] sm:$0xff]
        %v590 = vld [vmem:[%s559 + $0xf0] sm:$0xff]
        %v591 = vld [vmem:[%s559 + $0xf8] sm:$0xff]
        %v592 = vld [vmem:[%s559 + $0x100] sm:$0xff]
        %v593 = vld [vmem:[%s559 + $0x108] sm:$0xff]
        %v594 = vld [vmem:[%s559 + $0x110] sm:$0xff]
        %v595 = vld [vmem:[%s559 + $0x118] sm:$0xff]
        %v596 = vld [vmem:[%s559 + $0x120] sm:$0xff]
        %v597 = vld [vmem:[%s559 + $0x128] sm:$0xff]
        %v598 = vld [vmem:[%s559 + $0x130] sm:$0xff]
        %v599 = vld [vmem:[%s559 + $0x138] sm:$0xff]
        %v600 = vld [vmem:[%s559 + $0x140] sm:$0xff]
        %v601 = vld [vmem:[%s559 + $0x148] sm:$0xff]
        %v602 = vld [vmem:[%s559 + $0x150] sm:$0xff]
        %v603 = vld [vmem:[%s559 + $0x158] sm:$0xff]
        %v604 = vld [vmem:[%s559 + $0x160] sm:$0xff]
        %v605 = vld [vmem:[%s559 + $0x168] sm:$0xff]
        %v606 = vld [vmem:[%s559 + $0x170] sm:$0xff]
        %v607 = vld [vmem:[%s559 + $0x178] sm:$0xff]
        %v608 = vld [vmem:[%s559 + $0x180] sm:$0xff]
        %v609 = vld [vmem:[%s559 + $0x188] sm:$0xff]
        %v610 = vld [vmem:[%s559 + $0x190] sm:$0xff]
        %v611 = vld [vmem:[%s559 + $0x198] sm:$0xff]
        %v612 = vld [vmem:[%s559 + $0x1a0] sm:$0xff]
        %v613 = vld [vmem:[%s559 + $0x1a8] sm:$0xff]
        %v614 = vld [vmem:[%s559 + $0x1b0] sm:$0xff]
        %v615 = vld [vmem:[%s559 + $0x1b8] sm:$0xff]
        %v616 = vld [vmem:[%s559 + $0x1c0] sm:$0xff]
        %v617 = vld [vmem:[%s559 + $0x1c8] sm:$0xff]
        %v618 = vld [vmem:[%s559 + $0x1d0] sm:$0xff]
        %v619 = vld [vmem:[%s559 + $0x1d8] sm:$0xff]
        %v620 = vld [vmem:[%s559 + $0x1e0] sm:$0xff]
        %v621 = vld [vmem:[%s559 + $0x1e8] sm:$0xff]
        %v622 = vld [vmem:[%s559 + $0x1f0] sm:$0xff]
        %v623 = vld [vmem:[%s559 + $0x1f8] sm:$0xff]
        %v624 = vsub.f32 %v495, %v560
        %v625 = vsub.f32 %v496, %v561
        %v626 = vsub.f32 %v497, %v562
        %v627 = vsub.f32 %v498, %v563
        %v628 = vsub.f32 %v499, %v564
        %v629 = vsub.f32 %v500, %v565
        %v630 = vsub.f32 %v501, %v566
        %v631 = vsub.f32 %v502, %v567
        %v632 = vsub.f32 %v503, %v568
        %v633 = vsub.f32 %v504, %v569
        %v634 = vsub.f32 %v505, %v570
        %v635 = vsub.f32 %v506, %v571
        %v636 = vsub.f32 %v507, %v572
        %v637 = vsub.f32 %v508, %v573
        %v638 = vsub.f32 %v509, %v574
        %v639 = vsub.f32 %v510, %v575
        %v640 = vsub.f32 %v511, %v576
        %v641 = vsub.f32 %v512, %v577
        %v642 = vsub.f32 %v513, %v578
        %v643 = vsub.f32 %v514, %v579
        %v644 = vsub.f32 %v515, %v580
        %v645 = vsub.f32 %v516, %v581
        %v646 = vsub.f32 %v517, %v582
        %v647 = vsub.f32 %v518, %v583
        %v648 = vsub.f32 %v519, %v584
        %v649 = vsub.f32 %v520, %v585
        %v650 = vsub.f32 %v521, %v586
        %v651 = vsub.f32 %v522, %v587
        %v652 = vsub.f32 %v523, %v588
        %v653 = vsub.f32 %v524, %v589
        %v654 = vsub.f32 %v525, %v590
        %v655 = vsub.f32 %v526, %v591
        %v656 = vsub.f32 %v527, %v592
        %v657 = vsub.f32 %v528, %v593
        %v658 = vsub.f32 %v529, %v594
        %v659 = vsub.f32 %v530, %v595
        %v660 = vsub.f32 %v531, %v596
        %v661 = vsub.f32 %v532, %v597
        %v662 = vsub.f32 %v533, %v598
        %v663 = vsub.f32 %v534, %v599
        %v664 = vsub.f32 %v535, %v600
        %v665 = vsub.f32 %v536, %v601
        %v666 = vsub.f32 %v537, %v602
        %v667 = vsub.f32 %v538, %v603
        %v668 = vsub.f32 %v539, %v604
        %v669 = vsub.f32 %v540, %v605
        %v670 = vsub.f32 %v541, %v606
        %v671 = vsub.f32 %v542, %v607
        %v672 = vsub.f32 %v543, %v608
        %v673 = vsub.f32 %v544, %v609
        %v674 = vsub.f32 %v545, %v610
        %v675 = vsub.f32 %v546, %v611
        %v676 = vsub.f32 %v547, %v612
        %v677 = vsub.f32 %v548, %v613
        %v678 = vsub.f32 %v549, %v614
        %v679 = vsub.f32 %v550, %v615
        %v680 = vsub.f32 %v551, %v616
        %v681 = vsub.f32 %v552, %v617
        %v682 = vsub.f32 %v553, %v618
        %v683 = vsub.f32 %v554, %v619
        %v684 = vsub.f32 %v555, %v620
        %v685 = vsub.f32 %v556, %v621
        %v686 = vsub.f32 %v557, %v622
        %v687 = vsub.f32 %v558, %v623
        %v688 = vstv %s493
        %v689 = vadd.s32 %v423, %v688
        %v690 = vadd.s32 %v424, %v688
        %v691 = vadd.s32 %v425, %v688
        %v692 = vadd.s32 %v426, %v688
        %v693 = vadd.s32 %v427, %v688
        %v694 = vadd.s32 %v428, %v688
        %v695 = vadd.s32 %v429, %v688
        %v696 = vadd.s32 %v430, %v688
        %v697 = vadd.s32 %v431, %v688
        %v698 = vadd.s32 %v432, %v688
        %v699 = vadd.s32 %v433, %v688
        %v700 = vadd.s32 %v434, %v688
        %v701 = vadd.s32 %v435, %v688
        %v702 = vadd.s32 %v436, %v688
        %v703 = vadd.s32 %v437, %v688
        %v704 = vadd.s32 %v438, %v688
        %v705 = vadd.s32 %v439, %v688
        %v706 = vadd.s32 %v440, %v688
        %v707 = vadd.s32 %v441, %v688
        %v708 = vadd.s32 %v442, %v688
        %v709 = vadd.s32 %v443, %v688
        %v710 = vadd.s32 %v444, %v688
        %v711 = vadd.s32 %v445, %v688
        %v712 = vadd.s32 %v446, %v688
        %v713 = vadd.s32 %v447, %v688
        %v714 = vadd.s32 %v448, %v688
        %v715 = vadd.s32 %v449, %v688
        %v716 = vadd.s32 %v450, %v688
        %v717 = vadd.s32 %v451, %v688
        %v718 = vadd.s32 %v452, %v688
        %v719 = vadd.s32 %v453, %v688
        %v720 = vadd.s32 %v454, %v688
        %v721 = vadd.s32 %v455, %v688
        %v722 = vadd.s32 %v456, %v688
        %v723 = vadd.s32 %v457, %v688
        %v724 = vadd.s32 %v458, %v688
        %v725 = vadd.s32 %v459, %v688
        %v726 = vadd.s32 %v460, %v688
        %v727 = vadd.s32 %v461, %v688
        %v728 = vadd.s32 %v462, %v688
        %v729 = vadd.s32 %v463, %v688
        %v730 = vadd.s32 %v464, %v688
        %v731 = vadd.s32 %v465, %v688
        %v732 = vadd.s32 %v466, %v688
        %v733 = vadd.s32 %v467, %v688
        %v734 = vadd.s32 %v468, %v688
        %v735 = vadd.s32 %v469, %v688
        %v736 = vadd.s32 %v470, %v688
        %v737 = vadd.s32 %v471, %v688
        %v738 = vadd.s32 %v472, %v688
        %v739 = vadd.s32 %v473, %v688
        %v740 = vadd.s32 %v474, %v688
        %v741 = vadd.s32 %v475, %v688
        %v742 = vadd.s32 %v476, %v688
        %v743 = vadd.s32 %v477, %v688
        %v744 = vadd.s32 %v478, %v688
        %v745 = vadd.s32 %v479, %v688
        %v746 = vadd.s32 %v480, %v688
        %v747 = vadd.s32 %v481, %v688
        %v748 = vadd.s32 %v482, %v688
        %v749 = vadd.s32 %v483, %v688
        %v750 = vadd.s32 %v484, %v688
        %v751 = vadd.s32 %v485, %v688
        %v752 = vadd.s32 %v486, %v688
        %v753 = vstv %s82
        %vm754 = vcmp.lt.s32.totalorder %v689, %v753
        %vm755 = vcmp.lt.s32.totalorder %v690, %v753
        %vm756 = vcmp.lt.s32.totalorder %v691, %v753
        %vm757 = vcmp.lt.s32.totalorder %v692, %v753
        %vm758 = vcmp.lt.s32.totalorder %v693, %v753
        %vm759 = vcmp.lt.s32.totalorder %v694, %v753
        %vm760 = vcmp.lt.s32.totalorder %v695, %v753
        %vm761 = vcmp.lt.s32.totalorder %v696, %v753
        %vm762 = vcmp.lt.s32.totalorder %v697, %v753
        %vm763 = vcmp.lt.s32.totalorder %v698, %v753
        %vm764 = vcmp.lt.s32.totalorder %v699, %v753
        %vm765 = vcmp.lt.s32.totalorder %v700, %v753
        %vm766 = vcmp.lt.s32.totalorder %v701, %v753
        %vm767 = vcmp.lt.s32.totalorder %v702, %v753
        %vm768 = vcmp.lt.s32.totalorder %v703, %v753
        %vm769 = vcmp.lt.s32.totalorder %v704, %v753
        %vm770 = vcmp.lt.s32.totalorder %v705, %v753
        %vm771 = vcmp.lt.s32.totalorder %v706, %v753
        %vm772 = vcmp.lt.s32.totalorder %v707, %v753
        %vm773 = vcmp.lt.s32.totalorder %v708, %v753
        %vm774 = vcmp.lt.s32.totalorder %v709, %v753
        %vm775 = vcmp.lt.s32.totalorder %v710, %v753
        %vm776 = vcmp.lt.s32.totalorder %v711, %v753
        %vm777 = vcmp.lt.s32.totalorder %v712, %v753
        %vm778 = vcmp.lt.s32.totalorder %v713, %v753
        %vm779 = vcmp.lt.s32.totalorder %v714, %v753
        %vm780 = vcmp.lt.s32.totalorder %v715, %v753
        %vm781 = vcmp.lt.s32.totalorder %v716, %v753
        %vm782 = vcmp.lt.s32.totalorder %v717, %v753
        %vm783 = vcmp.lt.s32.totalorder %v718, %v753
        %vm784 = vcmp.lt.s32.totalorder %v719, %v753
        %vm785 = vcmp.lt.s32.totalorder %v720, %v753
        %vm786 = vcmp.lt.s32.totalorder %v721, %v753
        %vm787 = vcmp.lt.s32.totalorder %v722, %v753
        %vm788 = vcmp.lt.s32.totalorder %v723, %v753
        %vm789 = vcmp.lt.s32.totalorder %v724, %v753
        %vm790 = vcmp.lt.s32.totalorder %v725, %v753
        %vm791 = vcmp.lt.s32.totalorder %v726, %v753
        %vm792 = vcmp.lt.s32.totalorder %v727, %v753
        %vm793 = vcmp.lt.s32.totalorder %v728, %v753
        %vm794 = vcmp.lt.s32.totalorder %v729, %v753
        %vm795 = vcmp.lt.s32.totalorder %v730, %v753
        %vm796 = vcmp.lt.s32.totalorder %v731, %v753
        %vm797 = vcmp.lt.s32.totalorder %v732, %v753
        %vm798 = vcmp.lt.s32.totalorder %v733, %v753
        %vm799 = vcmp.lt.s32.totalorder %v734, %v753
        %vm800 = vcmp.lt.s32.totalorder %v735, %v753
        %vm801 = vcmp.lt.s32.totalorder %v736, %v753
        %vm802 = vcmp.lt.s32.totalorder %v737, %v753
        %vm803 = vcmp.lt.s32.totalorder %v738, %v753
        %vm804 = vcmp.lt.s32.totalorder %v739, %v753
        %vm805 = vcmp.lt.s32.totalorder %v740, %v753
        %vm806 = vcmp.lt.s32.totalorder %v741, %v753
        %vm807 = vcmp.lt.s32.totalorder %v742, %v753
        %vm808 = vcmp.lt.s32.totalorder %v743, %v753
        %vm809 = vcmp.lt.s32.totalorder %v744, %v753
        %vm810 = vcmp.lt.s32.totalorder %v745, %v753
        %vm811 = vcmp.lt.s32.totalorder %v746, %v753
        %vm812 = vcmp.lt.s32.totalorder %v747, %v753
        %vm813 = vcmp.lt.s32.totalorder %v748, %v753
        %vm814 = vcmp.lt.s32.totalorder %v749, %v753
        %vm815 = vcmp.lt.s32.totalorder %v750, %v753
        %vm816 = vcmp.lt.s32.totalorder %v751, %v753
        %vm817 = vcmp.lt.s32.totalorder %v752, %v753
        %v818 = vsel %vm754, %v624, 0.0
        %v819 = vsel %vm755, %v625, 0.0
        %v820 = vsel %vm756, %v626, 0.0
        %v821 = vsel %vm757, %v627, 0.0
        %v822 = vsel %vm758, %v628, 0.0
        %v823 = vsel %vm759, %v629, 0.0
        %v824 = vsel %vm760, %v630, 0.0
        %v825 = vsel %vm761, %v631, 0.0
        %v826 = vsel %vm762, %v632, 0.0
        %v827 = vsel %vm763, %v633, 0.0
        %v828 = vsel %vm764, %v634, 0.0
        %v829 = vsel %vm765, %v635, 0.0
        %v830 = vsel %vm766, %v636, 0.0
        %v831 = vsel %vm767, %v637, 0.0
        %v832 = vsel %vm768, %v638, 0.0
        %v833 = vsel %vm769, %v639, 0.0
        %v834 = vsel %vm770, %v640, 0.0
        %v835 = vsel %vm771, %v641, 0.0
        %v836 = vsel %vm772, %v642, 0.0
        %v837 = vsel %vm773, %v643, 0.0
        %v838 = vsel %vm774, %v644, 0.0
        %v839 = vsel %vm775, %v645, 0.0
        %v840 = vsel %vm776, %v646, 0.0
        %v841 = vsel %vm777, %v647, 0.0
        %v842 = vsel %vm778, %v648, 0.0
        %v843 = vsel %vm779, %v649, 0.0
        %v844 = vsel %vm780, %v650, 0.0
        %v845 = vsel %vm781, %v651, 0.0
        %v846 = vsel %vm782, %v652, 0.0
        %v847 = vsel %vm783, %v653, 0.0
        %v848 = vsel %vm784, %v654, 0.0
        %v849 = vsel %vm785, %v655, 0.0
        %v850 = vsel %vm786, %v656, 0.0
        %v851 = vsel %vm787, %v657, 0.0
        %v852 = vsel %vm788, %v658, 0.0
        %v853 = vsel %vm789, %v659, 0.0
        %v854 = vsel %vm790, %v660, 0.0
        %v855 = vsel %vm791, %v661, 0.0
        %v856 = vsel %vm792, %v662, 0.0
        %v857 = vsel %vm793, %v663, 0.0
        %v858 = vsel %vm794, %v664, 0.0
        %v859 = vsel %vm795, %v665, 0.0
        %v860 = vsel %vm796, %v666, 0.0
        %v861 = vsel %vm797, %v667, 0.0
        %v862 = vsel %vm798, %v668, 0.0
        %v863 = vsel %vm799, %v669, 0.0
        %v864 = vsel %vm800, %v670, 0.0
        %v865 = vsel %vm801, %v671, 0.0
        %v866 = vsel %vm802, %v672, 0.0
        %v867 = vsel %vm803, %v673, 0.0
        %v868 = vsel %vm804, %v674, 0.0
        %v869 = vsel %vm805, %v675, 0.0
        %v870 = vsel %vm806, %v676, 0.0
        %v871 = vsel %vm807, %v677, 0.0
        %v872 = vsel %vm808, %v678, 0.0
        %v873 = vsel %vm809, %v679, 0.0
        %v874 = vsel %vm810, %v680, 0.0
        %v875 = vsel %vm811, %v681, 0.0
        %v876 = vsel %vm812, %v682, 0.0
        %v877 = vsel %vm813, %v683, 0.0
        %v878 = vsel %vm814, %v684, 0.0
        %v879 = vsel %vm815, %v685, 0.0
        %v880 = vsel %vm816, %v686, 0.0
        %v881 = vsel %vm817, %v687, 0.0
        %v882 = vld [vmem:[#allocation2] sm:$0xff]
        %v883 = vmul.f32 %v818, %v818
        %v884 = vmul.f32 %v819, %v819
        %v885 = vmul.f32 %v820, %v820
        %v886 = vmul.f32 %v821, %v821
        %v887 = vmul.f32 %v822, %v822
        %v888 = vmul.f32 %v823, %v823
        %v889 = vmul.f32 %v824, %v824
        %v890 = vmul.f32 %v825, %v825
        %v891 = vmul.f32 %v826, %v826
        %v892 = vmul.f32 %v827, %v827
        %v893 = vmul.f32 %v828, %v828
        %v894 = vmul.f32 %v829, %v829
        %v895 = vmul.f32 %v830, %v830
        %v896 = vmul.f32 %v831, %v831
        %v897 = vmul.f32 %v832, %v832
        %v898 = vmul.f32 %v833, %v833
        %v899 = vmul.f32 %v834, %v834
        %v900 = vmul.f32 %v835, %v835
        %v901 = vmul.f32 %v836, %v836
        %v902 = vmul.f32 %v837, %v837
        %v903 = vmul.f32 %v838, %v838
        %v904 = vmul.f32 %v839, %v839
        %v905 = vmul.f32 %v840, %v840
        %v906 = vmul.f32 %v841, %v841
        %v907 = vmul.f32 %v842, %v842
        %v908 = vmul.f32 %v843, %v843
        %v909 = vmul.f32 %v844, %v844
        %v910 = vmul.f32 %v845, %v845
        %v911 = vmul.f32 %v846, %v846
        %v912 = vmul.f32 %v847, %v847
        %v913 = vmul.f32 %v848, %v848
        %v914 = vmul.f32 %v849, %v849
        %v915 = vmul.f32 %v850, %v850
        %v916 = vmul.f32 %v851, %v851
        %v917 = vmul.f32 %v852, %v852
        %v918 = vmul.f32 %v853, %v853
        %v919 = vmul.f32 %v854, %v854
        %v920 = vmul.f32 %v855, %v855
        %v921 = vmul.f32 %v856, %v856
        %v922 = vmul.f32 %v857, %v857
        %v923 = vmul.f32 %v858, %v858
        %v924 = vmul.f32 %v859, %v859
        %v925 = vmul.f32 %v860, %v860
        %v926 = vmul.f32 %v861, %v861
        %v927 = vmul.f32 %v862, %v862
        %v928 = vmul.f32 %v863, %v863
        %v929 = vmul.f32 %v864, %v864
        %v930 = vmul.f32 %v865, %v865
        %v931 = vmul.f32 %v866, %v866
        %v932 = vmul.f32 %v867, %v867
        %v933 = vmul.f32 %v868, %v868
        %v934 = vmul.f32 %v869, %v869
        %v935 = vmul.f32 %v870, %v870
        %v936 = vmul.f32 %v871, %v871
        %v937 = vmul.f32 %v872, %v872
        %v938 = vmul.f32 %v873, %v873
        %v939 = vmul.f32 %v874, %v874
        %v940 = vmul.f32 %v875, %v875
        %v941 = vmul.f32 %v876, %v876
        %v942 = vmul.f32 %v877, %v877
        %v943 = vmul.f32 %v878, %v878
        %v944 = vmul.f32 %v879, %v879
        %v945 = vmul.f32 %v880, %v880
        %v946 = vmul.f32 %v881, %v881
        %v947 = vadd.f32 %v883, %v915
        %v948 = vadd.f32 %v884, %v916
        %v949 = vadd.f32 %v885, %v917
        %v950 = vadd.f32 %v886, %v918
        %v951 = vadd.f32 %v887, %v919
        %v952 = vadd.f32 %v888, %v920
        %v953 = vadd.f32 %v889, %v921
        %v954 = vadd.f32 %v890, %v922
        %v955 = vadd.f32 %v891, %v923
        %v956 = vadd.f32 %v892, %v924
        %v957 = vadd.f32 %v893, %v925
        %v958 = vadd.f32 %v894, %v926
        %v959 = vadd.f32 %v895, %v927
        %v960 = vadd.f32 %v896, %v928
        %v961 = vadd.f32 %v897, %v929
        %v962 = vadd.f32 %v898, %v930
        %v963 = vadd.f32 %v899, %v931
        %v964 = vadd.f32 %v900, %v932
        %v965 = vadd.f32 %v901, %v933
        %v966 = vadd.f32 %v902, %v934
        %v967 = vadd.f32 %v903, %v935
        %v968 = vadd.f32 %v904, %v936
        %v969 = vadd.f32 %v905, %v937
        %v970 = vadd.f32 %v906, %v938
        %v971 = vadd.f32 %v907, %v939
        %v972 = vadd.f32 %v908, %v940
        %v973 = vadd.f32 %v909, %v941
        %v974 = vadd.f32 %v910, %v942
        %v975 = vadd.f32 %v911, %v943
        %v976 = vadd.f32 %v912, %v944
        %v977 = vadd.f32 %v913, %v945
        %v978 = vadd.f32 %v914, %v946
        %v979 = vadd.f32 %v947, %v963
        %v980 = vadd.f32 %v948, %v964
        %v981 = vadd.f32 %v949, %v965
        %v982 = vadd.f32 %v950, %v966
        %v983 = vadd.f32 %v951, %v967
        %v984 = vadd.f32 %v952, %v968
        %v985 = vadd.f32 %v953, %v969
        %v986 = vadd.f32 %v954, %v970
        %v987 = vadd.f32 %v955, %v971
        %v988 = vadd.f32 %v956, %v972
        %v989 = vadd.f32 %v957, %v973
        %v990 = vadd.f32 %v958, %v974
        %v991 = vadd.f32 %v959, %v975
        %v992 = vadd.f32 %v960, %v976
        %v993 = vadd.f32 %v961, %v977
        %v994 = vadd.f32 %v962, %v978
        %v995 = vadd.f32 %v979, %v987
        %v996 = vadd.f32 %v980, %v988
        %v997 = vadd.f32 %v981, %v989
        %v998 = vadd.f32 %v982, %v990
        %v999 = vadd.f32 %v983, %v991
        %v1000 = vadd.f32 %v984, %v992
        %v1001 = vadd.f32 %v985, %v993
        %v1002 = vadd.f32 %v986, %v994
        %v1003 = vadd.f32 %v995, %v999
        %v1004 = vadd.f32 %v996, %v1000
        %v1005 = vadd.f32 %v997, %v1001
        %v1006 = vadd.f32 %v998, %v1002
        %v1007 = vadd.f32 %v1003, %v1005
        %v1008 = vadd.f32 %v1004, %v1006
        %v1009 = vadd.f32 %v1007, %v1008
        %v1010 = vadd.f32 %v882, %v1009
        %1011 = vst [vmem:[#allocation2] sm:$0xff] %v1010
      $region41: #{tpu_custom_call.1} parent=35 // loop_footer
        %s492 = sadd.s32 1, %s488
      $region42: #{tpu_custom_call.1} parent=35 // loop_footer_branch
        %487 = sbr.rel target = $region38
      $region43: #{tpu_custom_call.1} parent=35 // loop_exit
        _
    $region36: #{tpu_custom_call.1} parent=1 // pred_fallthru
      _
    // Predicated region
    $region44: #{tpu_custom_call.1} parent=1 // pred_check
      %p1012 = pneg %p74
    $region45: #{tpu_custom_call.1} parent=1 // pred_check_branch
      %1014 = sbr.rel (%p1012) target = $region47
    $region46: #{tpu_custom_call.1} parent=1 // pred_region
      %v1015 = vld [vmem:[#allocation2] sm:$0xff]
      %1016 = vadd.xlane.f32.xlu0 %v1015
      %v1017 = vpop.xlane.xlu0 %1016
      %v1018 = vrot.slane %v1017, 4
      %v1019 = vadd.f32 %v1017, %v1018
      %v1020 = vrot.slane %v1019, 2
      %v1021 = vadd.f32 %v1019, %v1020
      %v1022 = vrot.slane %v1021, 1
      %v1023 = vadd.f32 %v1021, %v1022
      %s1024 = vtos %v1023
      %s1025 = scalar_lea.smem [#allocation10], 0
      %1026 = sst [smem:[%s1025]] %s1024
    $region47: #{tpu_custom_call.1} parent=1 // pred_fallthru
      _
    // Predicated region
    $region48: #{tpu_custom_call.1} parent=1 // pred_check
      _
    $region49: #{tpu_custom_call.1} parent=1 // pred_check_branch
      %1028 = sbr.rel (0) target = $region51
    $region50: #{tpu_custom_call.1} parent=1 // pred_region
      %s1030 = ssub.s32 16, 16
      %1031 = vsyncadd [#allocation7], %s1030
      %1034 = dma.smem_to_hbm [#allocation10], 16, %s3, [#allocation7]
    $region51: #{tpu_custom_call.1} parent=1 // pred_fallthru
      _
    // Predicated region
    $region52: #{tpu_custom_call.1} parent=1 // pred_check
      _
    $region53: #{tpu_custom_call.1} parent=1 // pred_check_branch
      %1036 = sbr.rel (0) target = $region55
    $region54: #{tpu_custom_call.1} parent=1 // pred_region
      %1037 = dma.done [#allocation7], 16
    $region55: #{tpu_custom_call.1} parent=1 // pred_fallthru
      _
    %1038 = sfence
    %1039 = vsyncpa [#allocation6], 1
    %1040 = vsyncpa [#allocation9], 1
    %1041 = vsyncpa [#allocation7], 1

</llo_original>
